<compile_context>
chip_gen: v7x
topology: tpu7x:2x2x1
jax: 0.10.0
libtpu: 0.0.40
codegen_flags: <defaults>
</compile_context>

<pallas_src>
import jax
import jax.numpy as jnp
from jax.experimental import pallas as pl
from jax.experimental.pallas import tpu as pltpu


_TARGET_TILE_BYTES = 2 * 1024 * 1024  # per-input tile; 2 inputs x 2 buffers = 8 MiB
# fits comfortably under the scoped-VMEM defaults of v5e (16 MiB), v6e (32 MiB)
# and v7x (32 MiB scoped / 64 MiB physical).


def _round_up(x, m):
    return ((x + m - 1) // m) * m


def _spectral_partials_kernel(mask_ref, t_ref, p_ref, out_ref):
    # mask_ref : (1, Wp)  f32, 1.0 on lanes with a valid forward difference,
    #                           0.0 on the last lane of every original W-row.
    # t_ref/p_ref : (TILE_R, Wp) native dtype (f32 / bf16 / ...).
    # out_ref : (1, 2, 8, 128) f32 -- per-tile [sq_sum, slope_sq_sum] partials,
    #           broadcast into a lane-dense (8, 128) block.
    d = t_ref[...].astype(jnp.float32) - p_ref[...].astype(jnp.float32)
    wp = d.shape[-1]

    sq_sum = jnp.sum(d * d)

    # d_next[:, j] = d[:, (j + 1) % Wp]  (pltpu.roll follows jnp.roll semantics;
    # shift = Wp - 1 is the positive-shift equivalent of shift = -1).
    d_next = pltpu.roll(d, shift=wp - 1, axis=1)
    dd = (d_next - d) * mask_ref[...]            # boundary / wraparound lanes -> 0
    slope_sum = jnp.sum(dd * dd)

    out_ref[0, 0, :, :] = jnp.full((8, 128), sq_sum, dtype=jnp.float32)
    out_ref[0, 1, :, :] = jnp.full((8, 128), slope_sum, dtype=jnp.float32)


def _spectral_sums(y_true_2d, y_pred_2d, w_orig):
    """Return (sum((t-p)^2), sum((diff_t - diff_p)^2)) over the packed slab.

    y_*_2d: (Rp, Wp) with Wp = k * w_orig (k original rows packed per lane row).
    Slope differences are taken only *within* each original w_orig-segment.
    """
    rp, wp = y_true_2d.shape
    itemsize = jnp.dtype(y_true_2d.dtype).itemsize

    # Row tile: largest multiple of 8 under the per-input VMEM budget.
    rows = max(8, _TARGET_TILE_BYTES // (wp * itemsize))
    rows = max(8, (rows // 8) * 8)
    tile_r = _round_up(rp, 8) if rp <= rows else rows
    rp_pad = _round_up(rp, tile_r)

    if rp_pad != rp:
        # Zero rows contribute exactly 0 to both sums (d = 0, dd = 0).
        pad = ((0, rp_pad - rp), (0, 0))
        y_true_2d = jnp.pad(y_true_2d, pad)
        y_pred_2d = jnp.pad(y_pred_2d, pad)

    g = rp_pad // tile_r

    # 1.0 where the forward difference stays inside an original W-row.
    lane = jnp.arange(wp, dtype=jnp.int32)
    mask = (lane % w_orig != (w_orig - 1)).astype(jnp.float32).reshape(1, wp)

    cost = pl.CostEstimate(
        flops=8 * rp_pad * wp,
        transcendentals=0,
        bytes_accessed=2 * rp_pad * wp * itemsize + wp * 4 + g * 2 * 8 * 128 * 4,
    )

    partials = pl.pallas_call(
        _spectral_partials_kernel,
        out_shape=jax.ShapeDtypeStruct((g, 2, 8, 128), jnp.float32),
        grid=(g,),
        in_specs=[
            pl.BlockSpec((1, wp), lambda i: (0, 0)),          # mask (constant)
            pl.BlockSpec((tile_r, wp), lambda i: (i, 0)),     # y_true tile
            pl.BlockSpec((tile_r, wp), lambda i: (i, 0)),     # y_pred tile
        ],
        out_specs=pl.BlockSpec((1, 2, 8, 128), lambda i: (i, 0, 0, 0)),
        compiler_params=pltpu.CompilerParams(
            dimension_semantics=("parallel",),    # distinct output block per step
            vmem_limit_bytes=32 * 1024 * 1024,
        ),
        cost_estimate=cost,
    )(mask, y_true_2d, y_pred_2d)

    tile_sums = partials[:, :, 0, 0]              # (g, 2)
    return jnp.sum(tile_sums[:, 0]), jnp.sum(tile_sums[:, 1])


def spectral_difference_loss(y_true, y_pred, *, N, mse_lambda=2.0,
                             gradient_lambda=0.2, epoch=0):
    """JAX/Pallas equivalent of SpectralDifferenceLoss.forward.

    y_true, y_pred: (B, C, H, W) float arrays (NCHW, same as PyTorch).
    Returns a scalar float32 loss.
    """
    assert y_true.shape == y_pred.shape, \
        "Ground truth and prediction shapes do not match"
    B, C, H, W = y_true.shape
    R = B * C * H

    # Keep native dtype (no wrapper upcast: bf16 stays 2 bytes/elem over HBM).
    yt = y_true.reshape(R, W)
    yp = y_pred.reshape(R, W)

    # Lane packing for small W: pack k = 128 // W spectral rows per lane row so
    # the lane dimension is 128-wide (vregs fully used, lane-dense DMAs).
    if W < 128 and 128 % W == 0 and R % (128 // W) == 0:
        k = 128 // W
        yt = yt.reshape(R // k, k * W)
        yp = yp.reshape(R // k, k * W)

    sq_sum, slope_sq_sum = _spectral_sums(yt, yp, W)

    n_elems = B * C * H * W
    n_diff = B * C * H * (W - 1)

    mse = (sq_sum / n_elems) / (N * 2)
    # Guard W == 1 (PyTorch's mean over an empty diff tensor would be NaN).
    slope_loss = slope_sq_sum / max(n_diff, 1)

    if epoch == 0:
        return mse_lambda * mse + gradient_lambda * slope_loss
    norm = mse_lambda + gradient_lambda * 0.1 ** (epoch // 10)
    lamd_slope = gradient_lambda * 0.1 ** (epoch // 10)
    return mse_lambda / norm * mse + lamd_slope / norm * slope_loss


if __name__ == "__main__":
    key = jax.random.PRNGKey(0)

    def reference(y_true, y_pred, N, mse_lambda=2.0, gradient_lambda=0.2, epoch=0):
        yt = y_true.astype(jnp.float32)
        yp = y_pred.astype(jnp.float32)
        mse = jnp.mean((yt - yp) ** 2) / (N * 2)
        diff_true = yt[:, :, :, 1:] - yt[:, :, :, :-1]
        diff_pred = yp[:, :, :, 1:] - yp[:, :, :, :-1]
        slope = jnp.mean((diff_true - diff_pred) ** 2)
        if epoch == 0:
            return mse_lambda * mse + gradient_lambda * slope
        norm = mse_lambda + gradient_lambda * 0.1 ** (epoch // 10)
        lamd = gradient_lambda * 0.1 ** (epoch // 10)
        return mse_lambda / norm * mse + lamd / norm * slope

    # Primary config (NCHW, spectral axis last).
    B, C, H, W = 2, 4, 16, 16
    k1, k2 = jax.random.split(key)
    y_true = jax.random.normal(k1, (B, C, H, W), dtype=jnp.float32)
    y_pred = jax.random.normal(k2, (B, C, H, W), dtype=jnp.float32)
    N = W  # spectral length, matches the module's N constructor arg

    loss = jax.block_until_ready(
        spectral_difference_loss(y_true, y_pred, N=N, epoch=0))
    ref = reference(y_true, y_pred, N, epoch=0)
    assert jnp.allclose(loss, ref, rtol=1e-5, atol=1e-6), (loss, ref)

    # Exercise the epoch > 0 weighting branch.
    loss_e5 = jax.block_until_ready(
        spectral_difference_loss(y_true, y_pred, N=N, epoch=5))
    ref_e5 = reference(y_true, y_pred, N, epoch=5)
    assert jnp.allclose(loss_e5, ref_e5, rtol=1e-5, atol=1e-6), (loss_e5, ref_e5)

    # A shape that exercises lane packing + zero-row padding (R=40 -> Rp=5 -> pad 8).
    B2, C2, H2, W2 = 1, 1, 40, 16
    k3, k4 = jax.random.split(k2)
    yt2 = jax.random.normal(k3, (B2, C2, H2, W2), dtype=jnp.float32)
    yp2 = jax.random.normal(k4, (B2, C2, H2, W2), dtype=jnp.float32)
    loss2 = jax.block_until_ready(
        spectral_difference_loss(yt2, yp2, N=W2, epoch=0))
    ref2 = reference(yt2, yp2, W2, epoch=0)
    assert jnp.allclose(loss2, ref2, rtol=1e-5, atol=1e-6), (loss2, ref2)

    print("KERNEL_OK")
</pallas_src>

<mosaic_0001>
module attributes {stable_mosaic.version = 11 : i64} {
  func.func @_spectral_partials_kernel(%arg0: i32, %arg1: memref<1x128xf32, #tpu.memory_space<vmem>>, %arg2: memref<16x128xf32, #tpu.memory_space<vmem>>, %arg3: memref<16x128xf32, #tpu.memory_space<vmem>>, %arg4: memref<1x2x8x128xf32, #tpu.memory_space<vmem>>) attributes {dimension_semantics = [#tpu.dimension_semantics<parallel>], iteration_bounds = array<i64: 1>, scalar_prefetch = 0 : i64, scratch_operands = 0 : i64, tpu.core_type = #tpu.core_type<tc>, window_params = [{pipeline_mode = #tpu.pipeline_mode<synchronous>, transform_indices = @transform_0, window_bounds = array<i64: 1, 128>}, {transform_indices = @transform_1, window_bounds = array<i64: 16, 128>}, {transform_indices = @transform_2, window_bounds = array<i64: 16, 128>}, {transform_indices = @transform_3, window_bounds = array<i64: 1, 2, 8, 128>}]} {
    %c0 = arith.constant 0 : index
    %c0_0 = arith.constant 0 : index
    %0 = vector.load %arg2[%c0, %c0_0] : memref<16x128xf32, #tpu.memory_space<vmem>>, vector<16x128xf32>
    %c0_1 = arith.constant 0 : index
    %c0_2 = arith.constant 0 : index
    %1 = vector.load %arg3[%c0_1, %c0_2] : memref<16x128xf32, #tpu.memory_space<vmem>>, vector<16x128xf32>
    %2 = arith.subf %0, %1 : vector<16x128xf32>
    %3 = arith.mulf %2, %2 : vector<16x128xf32>
    %4 = vector.shape_cast %3 : vector<16x128xf32> to vector<1x16x128xf32>
    %cst = arith.constant dense<0.000000e+00> : vector<1xf32>
    %5 = vector.multi_reduction <add>, %4, %cst [1, 2] : vector<1x16x128xf32> to vector<1xf32>
    %6 = vector.shape_cast %5 : vector<1xf32> to vector<1x1x1xf32>
    %7 = vector.extract %6[0, 0, 0] : f32 from vector<1x1x1xf32>
    %c127_i32 = arith.constant 127 : i32
    %8 = tpu.dynamic_rotate %2 by %c127_i32 dim 1 : vector<16x128xf32>, i32 -> vector<16x128xf32>
    %9 = arith.subf %8, %2 : vector<16x128xf32>
    %c0_3 = arith.constant 0 : index
    %c0_4 = arith.constant 0 : index
    %10 = vector.load %arg1[%c0_3, %c0_4] : memref<1x128xf32, #tpu.memory_space<vmem>>, vector<1x128xf32>
    %11 = vector.broadcast %10 : vector<1x128xf32> to vector<16x128xf32>
    %12 = arith.mulf %9, %11 : vector<16x128xf32>
    %13 = arith.mulf %12, %12 : vector<16x128xf32>
    %14 = vector.shape_cast %13 : vector<16x128xf32> to vector<1x16x128xf32>
    %cst_5 = arith.constant dense<0.000000e+00> : vector<1xf32>
    %15 = vector.multi_reduction <add>, %14, %cst_5 [1, 2] : vector<1x16x128xf32> to vector<1xf32>
    %16 = vector.shape_cast %15 : vector<1xf32> to vector<1x1x1xf32>
    %17 = vector.extract %16[0, 0, 0] : f32 from vector<1x1x1xf32>
    %18 = vector.broadcast %7 : f32 to vector<8x128xf32>
    %c0_6 = arith.constant 0 : index
    %c0_7 = arith.constant 0 : index
    %c0_8 = arith.constant 0 : index
    %c0_9 = arith.constant 0 : index
    %19 = vector.load %arg4[%c0_6, %c0_7, %c0_8, %c0_9] : memref<1x2x8x128xf32, #tpu.memory_space<vmem>>, vector<1x1x8x128xf32>
    %20 = vector.shape_cast %19 : vector<1x1x8x128xf32> to vector<8x128xf32>
    %21 = vector.shape_cast %18 : vector<8x128xf32> to vector<1x1x8x128xf32>
    tpu.vector_store %arg4[%c0_6, %c0_7, %c0_8, %c0_9], %21 {strides = array<i32>} : memref<1x2x8x128xf32, #tpu.memory_space<vmem>>, vector<1x1x8x128xf32>,
    %22 = vector.broadcast %17 : f32 to vector<8x128xf32>
    %c0_10 = arith.constant 0 : index
    %c1 = arith.constant 1 : index
    %c0_11 = arith.constant 0 : index
    %c0_12 = arith.constant 0 : index
    %23 = vector.load %arg4[%c0_10, %c1, %c0_11, %c0_12] : memref<1x2x8x128xf32, #tpu.memory_space<vmem>>, vector<1x1x8x128xf32>
    %24 = vector.shape_cast %23 : vector<1x1x8x128xf32> to vector<8x128xf32>
    %25 = vector.shape_cast %22 : vector<8x128xf32> to vector<1x1x8x128xf32>
    tpu.vector_store %arg4[%c0_10, %c1, %c0_11, %c0_12], %25 {strides = array<i32>} : memref<1x2x8x128xf32, #tpu.memory_space<vmem>>, vector<1x1x8x128xf32>,
    return
  }
  func.func @transform_0(%arg0: i32) -> (i32, i32) {
    %c0_i32 = arith.constant 0 : i32
    %c0_i32_0 = arith.constant 0 : i32
    %c0_i32_1 = arith.constant 0 : i32
    return %c0_i32, %c0_i32_0 : i32, i32
  }
  func.func @transform_1(%arg0: i32) -> (i32, i32) {
    %c0_i32 = arith.constant 0 : i32
    %c0_i32_0 = arith.constant 0 : i32
    return %arg0, %c0_i32 : i32, i32
  }
  func.func @transform_2(%arg0: i32) -> (i32, i32) {
    %c0_i32 = arith.constant 0 : i32
    %c0_i32_0 = arith.constant 0 : i32
    return %arg0, %c0_i32 : i32, i32
  }
  func.func @transform_3(%arg0: i32) -> (i32, i32, i32, i32) {
    %c0_i32 = arith.constant 0 : i32
    %c0_i32_0 = arith.constant 0 : i32
    %c0_i32_1 = arith.constant 0 : i32
    %c0_i32_2 = arith.constant 0 : i32
    return %arg0, %c0_i32, %c0_i32_0, %c0_i32_1 : i32, i32, i32, i32
  }
}

</mosaic_0001>

<llo_original>
// kernel: tpu_custom_call.1
$region0: #{tpu_custom_call.1}
  #allocation0 [shape = 'u32[]', space=smem, size = 0x4, offset = 0x4, fixed_abs, tag = 'smem constant byte address 0x4 - core index']
  #allocation1 [shape = 'u32[144,128]{1,0:T(1,128)}', space=vmem, size = 0x12000, scoped, tag = 'internal scratch']
  %s0 = inlined_call_operand.hbm [shape: f32[1,128], index: 0, kind: input, shape index: {}]
  %s1 = inlined_call_operand.hbm [shape: f32[16,128], index: 1, kind: input, shape index: {}]
  %s2 = inlined_call_operand.hbm [shape: f32[16,128], index: 2, kind: input, shape index: {}]
  %s3 = inlined_call_operand.hbm [shape: f32[1,2,8,128], index: 3, kind: output, shape index: {}]
  %s4 = sld [smem:[#allocation0]]
  $region34: #{tpu_custom_call.1} parent=0
    _
  %s6 = ssub.s32 1, %s4
  %s7 = scalar_select 0, %s6, %s4
  $region1: #{tpu_custom_call.1} parent=0
    #allocation2 [shape = 'u8[512]{0}', space=vmem, size = 0x400, scoped, tag = 'input window, operand 0, single buffered']
    #allocation3 [shape = 's32[1]{0}', space=sflag, size = 0x4, scoped, tag = 'scoped memory for tpu_custom_call.1']
    #allocation4 [shape = 's32[1]{0}', space=sflag, size = 0x4, scoped, tag = 'scoped memory for tpu_custom_call.1']
    #allocation5 [shape = 'u8[8192]{0}', space=vmem, size = 0x2000, scoped, tag = 'input window, operand 1, single buffered']
    #allocation6 [shape = 's32[1]{0}', space=sflag, size = 0x4, scoped, tag = 'scoped memory for tpu_custom_call.1']
    #allocation7 [shape = 'u8[8192]{0}', space=vmem, size = 0x2000, scoped, tag = 'input window, operand 2, single buffered']
    #allocation8 [shape = 'u8[8192]{0}', space=vmem, size = 0x2000, scoped, tag = 'output window, operand 0, single buffered']
    %8 = vsyncpa [#allocation3], 0
    %9 = vsyncpa [#allocation6], 0
    %10 = vsyncpa [#allocation4], 0
    // Predicated region
    $region2: #{tpu_custom_call.1} parent=1 // pred_check
      _
    $region3: #{tpu_custom_call.1} parent=1 // pred_check_branch
      %12 = sbr.rel (0) target = $region5
    $region4: #{tpu_custom_call.1} parent=1 // pred_region
      %s14 = ssub.s32 16, 16
      %15 = vsyncadd [#allocation3], %s14
      %s17 = sshll.u32 [#allocation2], 4
      %s18 = int_to_ptr.vmem [resolvable:$true] %s17
      %20 = dma.hbm_to_vmem [thread:$0]  %s0, 16, %s18, [#allocation3]
    $region5: #{tpu_custom_call.1} parent=1 // pred_fallthru
      _
    // Predicated region
    $region6: #{tpu_custom_call.1} parent=1 // pred_check
      _
    $region7: #{tpu_custom_call.1} parent=1 // pred_check_branch
      %22 = sbr.rel (0) target = $region9
    $region8: #{tpu_custom_call.1} parent=1 // pred_region
      %s24 = ssub.s32 256, 256
      %25 = vsyncadd [#allocation6], %s24
      %s26 = sshll.u32 [#allocation5], 4
      %s27 = int_to_ptr.vmem [resolvable:$true] %s26
      %32 = dma.hbm_to_vmem [thread:$0]  %s1, 256, %s27, [#allocation6], 128, 128, 8
    $region9: #{tpu_custom_call.1} parent=1 // pred_fallthru
      _
    // Predicated region
    $region10: #{tpu_custom_call.1} parent=1 // pred_check
      _
    $region11: #{tpu_custom_call.1} parent=1 // pred_check_branch
      %34 = sbr.rel (0) target = $region13
    $region12: #{tpu_custom_call.1} parent=1 // pred_region
      %s36 = ssub.s32 256, 256
      %37 = vsyncadd [#allocation6], %s36
      %s38 = sshll.u32 [#allocation7], 4
      %s39 = int_to_ptr.vmem [resolvable:$true] %s38
      %44 = dma.hbm_to_vmem [thread:$0]  %s2, 256, %s39, [#allocation6], 128, 128, 8
    $region13: #{tpu_custom_call.1} parent=1 // pred_fallthru
      _
    // Predicated region
    $region14: #{tpu_custom_call.1} parent=1 // pred_check
      _
    $region15: #{tpu_custom_call.1} parent=1 // pred_check_branch
      %46 = sbr.rel (0) target = $region17
    $region16: #{tpu_custom_call.1} parent=1 // pred_region
      %47 = dma.done [#allocation3], 16
    $region17: #{tpu_custom_call.1} parent=1 // pred_fallthru
      _
    // Predicated region
    $region18: #{tpu_custom_call.1} parent=1 // pred_check
      _
    $region19: #{tpu_custom_call.1} parent=1 // pred_check_branch
      %49 = sbr.rel (0) target = $region21
    $region20: #{tpu_custom_call.1} parent=1 // pred_region
      %50 = dma.done [#allocation6], 256
    $region21: #{tpu_custom_call.1} parent=1 // pred_fallthru
      _
    // Predicated region
    $region22: #{tpu_custom_call.1} parent=1 // pred_check
      _
    $region23: #{tpu_custom_call.1} parent=1 // pred_check_branch
      %52 = sbr.rel (0) target = $region25
    $region24: #{tpu_custom_call.1} parent=1 // pred_region
      %53 = dma.done [#allocation6], 256
    $region25: #{tpu_custom_call.1} parent=1 // pred_fallthru
      _
    %v54 = vld [vmem:[#allocation5] sm:$0xff]
    %v55 = vld [vmem:[#allocation5 + $0x8] sm:$0xff]
    %v56 = vld [vmem:[#allocation7] sm:$0xff]
    %v57 = vld [vmem:[#allocation7 + $0x8] sm:$0xff]
    %v58 = vsub.f32 %v54, %v56
    %v59 = vsub.f32 %v55, %v57
    %v60 = vmul.f32 %v58, %v58
    %v61 = vmul.f32 %v59, %v59
    %v62 = vadd.f32 %v60, %v61
    %63 = vadd.xlane.f32.xlu0 %v62
    %v64 = vpop.xlane.xlu0 %63
    %v65 = vrot.slane %v64, 4
    %v66 = vadd.f32 %v64, %v65
    %v67 = vrot.slane %v66, 2
    %v68 = vadd.f32 %v66, %v67
    %v69 = vrot.slane %v68, 1
    %v70 = vadd.f32 %v68, %v69
    %s71 = vtos %v70
    %72 = vrot.lane.b32.xlu0 %v58, 127
    %v73 = vpop.permute.xlu0 %72
    %74 = vrot.lane.b32.xlu0 %v59, 127
    %v75 = vpop.permute.xlu0 %74
    %v76 = vsub.f32 %v73, %v58
    %v77 = vsub.f32 %v75, %v59
    %v78 = vld [vmem:[#allocation2] sm:$0x1]
    %v80 = vlaneseq
    %v81 = vshrl.u32 %v80, 7
    %v82 = vsub.s32 0, %v81
    %v83 = vrot.slane %v78, %v82
    %v85 = vmul.f32 %v76, %v83
    %v86 = vmul.f32 %v77, %v83
    %v87 = vmul.f32 %v85, %v85
    %v88 = vmul.f32 %v86, %v86
    %v89 = vadd.f32 %v87, %v88
    %90 = vadd.xlane.f32.xlu0 %v89
    %v91 = vpop.xlane.xlu0 %90
    %v92 = vrot.slane %v91, 4
    %v93 = vadd.f32 %v91, %v92
    %v94 = vrot.slane %v93, 2
    %v95 = vadd.f32 %v93, %v94
    %v96 = vrot.slane %v95, 1
    %v97 = vadd.f32 %v95, %v96
    %s98 = vtos %v97
    %v99 = vstv %s71
    %100 = vst [vmem:[#allocation8] sm:$0xff] %v99
    %v101 = vstv %s98
    %s102 = scalar_lea.vmem [#allocation8], 8
    %103 = vst [vmem:[%s102] sm:$0xff] %v101
    // Predicated region
    $region26: #{tpu_custom_call.1} parent=1 // pred_check
      _
    $region27: #{tpu_custom_call.1} parent=1 // pred_check_branch
      %105 = sbr.rel (0) target = $region29
    $region28: #{tpu_custom_call.1} parent=1 // pred_region
      %s107 = ssub.s32 256, 256
      %108 = vsyncadd [#allocation4], %s107
      %s109 = sshll.u32 [#allocation8], 4
      %s110 = int_to_ptr.vmem [resolvable:$true] %s109
      %115 = dma.vmem_to_hbm [thread:$0]  %s110, 256, %s3, [#allocation4], 128, 128, 8
    $region29: #{tpu_custom_call.1} parent=1 // pred_fallthru
      _
    // Predicated region
    $region30: #{tpu_custom_call.1} parent=1 // pred_check
      _
    $region31: #{tpu_custom_call.1} parent=1 // pred_check_branch
      %117 = sbr.rel (0) target = $region33
    $region32: #{tpu_custom_call.1} parent=1 // pred_region
      %118 = dma.done [#allocation4], 256
    $region33: #{tpu_custom_call.1} parent=1 // pred_fallthru
      _
    %119 = vsyncpa [#allocation3], 1
    %120 = vsyncpa [#allocation6], 1
    %121 = vsyncpa [#allocation4], 1

</llo_original>
